<compile_context>
chip_gen: v7x
topology: tpu7x:2x2x1
jax: 0.10.0
libtpu: 0.0.40
codegen_flags: <defaults>
</compile_context>

<pallas_src>
import jax
import jax.numpy as jnp
from jax.experimental import pallas as pl
from jax.experimental.pallas import tpu as pltpu

EPS = 1e-5
_VMEM_LIMIT = 48 * 1024 * 1024   # explicit budget: fits v7x's 64 MiB VMEM with headroom


# ----------------------------------------------------------------------------
# Pallas kernels
# ----------------------------------------------------------------------------
def qkv_kernel(feat_ref, w_ref, b_ref, q_out, kv_out):
    """Fused q/k/v projection:  y = x @ [Wq'|Wk'|Wv] + [bq'|bk'|bv]  (BN folded).

    One [tn, C] x [C, 3C] bf16 matmul instead of three [tn, C] x [C, C] MXU
    passes; q is emitted in f32, k and v are packed into one [tn, 2C] bf16 slab
    so the downstream neighbour gather touches a single half-width tensor.
    """
    C = q_out.shape[-1]
    x = feat_ref[...].astype(w_ref.dtype)                       # bf16 on the MXU
    y = jnp.dot(x, w_ref[...], preferred_element_type=jnp.float32) + b_ref[...]
    q_out[...] = jnp.maximum(y[:, 0:C], 0.0)                    # ReLU(BN(x Wq + bq))
    kv_out[:, 0:C] = jnp.maximum(y[:, C:2 * C], 0.0).astype(kv_out.dtype)   # k
    kv_out[:, C:2 * C] = y[:, 2 * C:3 * C].astype(kv_out.dtype)             # v


def attn_kernel(q_ref, kv_ref, pos_ref, mask_ref,
                pe_ref, wp2_ref, we1_ref, we2_ref, expand_ref,
                out_ref):
    """Grouped vector attention for one tile of tn points (S neighbours each)."""
    tn, S, two_c = kv_ref.shape
    C = two_c // 2
    G = we1_ref.shape[-1]
    cdt = wp2_ref.dtype                                          # MXU compute dtype

    q = q_ref[...]                                               # [tn, C]     f32
    key = kv_ref[:, :, 0:C].astype(jnp.float32)                  # [tn, S, C]
    val = kv_ref[:, :, C:2 * C].astype(jnp.float32)              # [tn, S, C]
    pos = pos_ref[...]                                           # [tn, S, 3]  f32
    mask = mask_ref[...]                                         # [tn, S]     f32

    # pe-bias MLP layer 1 (Linear(3->C) -> BN(eval) -> ReLU) as 3 VPU broadcast-FMAs:
    # a K=3 contraction would waste a full MXU pass on 3/128 of its rows.
    h = (pos[:, :, 0:1] * pe_ref[0:1, :].reshape(1, 1, C)
         + pos[:, :, 1:2] * pe_ref[1:2, :].reshape(1, 1, C)
         + pos[:, :, 2:3] * pe_ref[2:3, :].reshape(1, 1, C)
         + pe_ref[3:4, :].reshape(1, 1, C))
    h = jnp.maximum(h, 0.0)
    # pe-bias layer 2: Linear(C->C) on the MXU (bf16 operands, f32 accumulation).
    peb = jnp.dot(h.reshape(tn * S, C).astype(cdt), wp2_ref[...],
                  preferred_element_type=jnp.float32) + pe_ref[4:5, :]
    peb = peb.reshape(tn, S, C)

    rel = key - q[:, None, :] + peb                              # relation_qk (pe_bias)
    val = val + peb

    # weight encoding: Linear(C->G) -> BN(eval) -> ReLU -> Linear(G->G)  (BN folded)
    w = jnp.dot(rel.reshape(tn * S, C).astype(cdt), we1_ref[...],
                preferred_element_type=jnp.float32) + we2_ref[G:G + 1, :]
    w = jnp.maximum(w, 0.0)
    w = jnp.dot(w.astype(cdt), we2_ref[0:G, :].astype(cdt),
                preferred_element_type=jnp.float32) + we2_ref[G + 1:G + 2, :]
    w = w.reshape(tn, S, G)

    # softmax over the neighbour axis S (torch dim=1); padded neighbours are masked
    # AFTER the softmax, exactly like the reference (they do hit the denominator).
    w = w - jnp.max(w, axis=1, keepdims=True)
    e = jnp.exp(w)
    w = e * pl.reciprocal(jnp.sum(e, axis=1, keepdims=True), approx=True)
    w = w * mask[:, :, None]

    # einsum('n s g i, n s g -> n g i') via a [G, C] group-expansion matmul so the
    # lane reshuffle stays on the MXU, then multiply + reduce over S.
    # TODO(synk): profile whether an XLU lane-replication beats this K=G MXU pass.
    w_full = jnp.dot(w.reshape(tn * S, G), expand_ref[...],
                     preferred_element_type=jnp.float32).reshape(tn, S, C)
    out_ref[...] = jnp.sum(val * w_full, axis=1)                 # [tn, C]


# ----------------------------------------------------------------------------
# Parameters / helpers
# ----------------------------------------------------------------------------
def _fold_bn(gamma, beta, mean, var):
    """Eval-mode BatchNorm1d -> per-channel (scale, shift): y = x*scale + shift."""
    scale = gamma / jnp.sqrt(var + EPS)
    return scale, beta - mean * scale


def _round_up(x, m):
    return (x + m - 1) // m * m


def _pick_tile_n(n_points, requested=None):
    """Point-tile size.  Sweep 128/256/512 per generation for peak throughput."""
    if requested is None:
        try:
            kind = jax.devices()[0].device_kind.lower()
        except Exception:  # pragma: no cover
            kind = ""
        # v7x has half the VMEM (64 MiB) of v5e/v6e -> smaller default tile there.
        requested = 128 if "7" in kind else 256
    tn = min(int(requested), _round_up(n_points, 8))
    return max(8, _round_up(tn, 8))


def init_params(key, C, G):
    ks = jax.random.split(key, 11)

    def lin(k, fan_in, fan_out):
        k1, k2 = jax.random.split(k)
        w = jax.random.normal(k1, (fan_in, fan_out), jnp.float32) / jnp.sqrt(float(fan_in))
        b = 0.02 * jax.random.normal(k2, (fan_out,), jnp.float32)
        return w, b

    def bn(k, dim):
        k1, k2, k3, k4 = jax.random.split(k, 4)
        gamma = 1.0 + 0.1 * jax.random.normal(k1, (dim,), jnp.float32)
        beta = 0.05 * jax.random.normal(k2, (dim,), jnp.float32)
        mean = 0.1 * jax.random.normal(k3, (dim,), jnp.float32)
        var = jax.random.uniform(k4, (dim,), jnp.float32, minval=0.5, maxval=1.5)
        return gamma, beta, mean, var

    p = {}
    p["wq"], p["bq"] = lin(ks[0], C, C); p["bn_q"] = bn(ks[1], C)
    p["wk"], p["bk"] = lin(ks[2], C, C); p["bn_k"] = bn(ks[3], C)
    p["wv"], p["bv"] = lin(ks[4], C, C)
    p["wp1"], p["bp1"] = lin(ks[5], 3, C); p["bn_p"] = bn(ks[6], C)
    p["wp2"], p["bp2"] = lin(ks[7], C, C)
    p["wwe1"], p["bwe1"] = lin(ks[8], C, G); p["bn_we"] = bn(ks[9], G)
    p["wwe2"], p["bwe2"] = lin(ks[10], G, G)
    return p


# ----------------------------------------------------------------------------
# Wrapper
# ----------------------------------------------------------------------------
def grouped_vector_attention(params, feat, coord, reference_index, *,
                             groups, tn=None, compute_dtype=jnp.bfloat16):
    """GroupedVectorAttention.forward (eval BN, pe_bias=True, pe_multiplier=False,
    attn_drop=0) using Pallas TPU kernels for the projections and attention core."""
    N, C = feat.shape
    S = reference_index.shape[1]
    G = groups
    I = C // G
    assert C % G == 0

    tn = _pick_tile_n(N, tn)
    n_pad = _round_up(N, tn)
    if n_pad != N:                         # pad to a whole number of tiles
        extra = n_pad - N
        feat = jnp.pad(feat, ((0, extra), (0, 0)))
        coord = jnp.pad(coord, ((0, extra), (0, 0)))
        reference_index = jnp.pad(reference_index, ((0, extra), (0, 0)),
                                  constant_values=-1)
    n_tiles = n_pad // tn

    # ---- fold eval-mode BatchNorm into the adjacent linears, pack params ----
    sq, tq = _fold_bn(*params["bn_q"])
    sk, tk = _fold_bn(*params["bn_k"])
    sp, tp = _fold_bn(*params["bn_p"])
    swe, twe = _fold_bn(*params["bn_we"])

    w_qkv = jnp.concatenate([params["wq"] * sq, params["wk"] * sk, params["wv"]],
                            axis=1).astype(compute_dtype)                # [C, 3C] bf16
    b_qkv = jnp.concatenate([params["bq"] * sq + tq,
                             params["bk"] * sk + tk,
                             params["bv"]])[None, :]                     # [1, 3C] f32

    pe_pack = jnp.concatenate([params["wp1"] * sp,                       # rows 0..2
                               (params["bp1"] * sp + tp)[None, :],       # row 3
                               params["bp2"][None, :]], axis=0)          # row 4 -> [5, C]
    wp2 = params["wp2"].astype(compute_dtype)                            # [C, C] bf16
    we1 = (params["wwe1"] * swe).astype(compute_dtype)                   # [C, G] bf16
    we_pack = jnp.concatenate([params["wwe2"],                           # rows 0..G-1
                               (params["bwe1"] * swe + twe)[None, :],    # row G
                               params["bwe2"][None, :]], axis=0)         # [G+2, G] f32
    # group-expansion matrix: expand[g, c] = 1 iff c // I == g
    expand = jnp.repeat(jnp.eye(G, dtype=jnp.float32), I, axis=1)        # [G, C]

    def const_spec(a):
        nd = a.ndim
        return pl.BlockSpec(a.shape, lambda i, _nd=nd: (0,) * _nd)

    cparams = pltpu.CompilerParams(dimension_semantics=("parallel",),
                                   vmem_limit_bytes=_VMEM_LIMIT)

    # ---- fused q / k / v projection ----
    qkv_cost = pl.CostEstimate(
        flops=2 * n_pad * C * 3 * C,
        transcendentals=0,
        bytes_accessed=(n_pad * C * 4 + C * 3 * C * 2 + 3 * C * 4
                        + n_pad * C * 4 + n_pad * 2 * C * 2))
    q, kv = pl.pallas_call(
        qkv_kernel,
        grid=(n_tiles,),
        in_specs=[pl.BlockSpec((tn, C), lambda i: (i, 0)),
                  const_spec(w_qkv), const_spec(b_qkv)],
        out_specs=(pl.BlockSpec((tn, C), lambda i: (i, 0)),
                   pl.BlockSpec((tn, 2 * C), lambda i: (i, 0))),
        out_shape=(jax.ShapeDtypeStruct((n_pad, C), jnp.float32),
                   jax.ShapeDtypeStruct((n_pad, 2 * C), compute_dtype)),
        compiler_params=cparams,
        cost_estimate=qkv_cost,
    )(feat, w_qkv, b_qkv)

    # ---- pointops.grouping glue: neighbour gather (plain JAX / XLA gather) ----
    # k|v are gathered as ONE packed bf16 [N, 2C] tensor -> 4x fewer gathered HBM
    # bytes than the original two f32 gathers.  Padded (-1) entries gather row 0
    # and are zeroed later by the sign() mask, exactly like the reference.
    idx = reference_index
    idx_safe = jnp.where(idx < 0, 0, idx)
    kv_g = kv[idx_safe]                                    # [N, S, 2C]  bf16
    pos = coord[idx_safe] - coord[:, None, :]              # [N, S, 3]   f32
    mask = jnp.sign(idx + 1).astype(jnp.float32)           # [N, S]

    # ---- grouped vector attention ----
    attn_cost = pl.CostEstimate(
        flops=(2 * n_pad * S * (3 * C + C * C + C * G + G * G + G * C)
               + 6 * n_pad * S * C),
        transcendentals=n_pad * S * G + n_pad * G,
        bytes_accessed=(n_pad * C * 4 + n_pad * S * 2 * C * 2 + n_pad * S * 3 * 4
                        + n_pad * S * 4 + n_pad * C * 4
                        + (5 * C + C * C + C * G + (G + 2) * G + G * C) * 4))
    out = pl.pallas_call(
        attn_kernel,
        grid=(n_tiles,),
        in_specs=[pl.BlockSpec((tn, C), lambda i: (i, 0)),
                  pl.BlockSpec((tn, S, 2 * C), lambda i: (i, 0, 0)),
                  pl.BlockSpec((tn, S, 3), lambda i: (i, 0, 0)),
                  pl.BlockSpec((tn, S), lambda i: (i, 0)),
                  const_spec(pe_pack), const_spec(wp2), const_spec(we1),
                  const_spec(we_pack), const_spec(expand)],
        out_specs=pl.BlockSpec((tn, C), lambda i: (i, 0)),
        out_shape=jax.ShapeDtypeStruct((n_pad, C), jnp.float32),
        compiler_params=cparams,
        cost_estimate=attn_cost,
    )(q, kv_g, pos, mask, pe_pack, wp2, we1, we_pack, expand)

    return out[:N]


# ----------------------------------------------------------------------------
# Pure-JAX reference (mirrors the PyTorch forward with eval-mode BN; matmul
# operands are cast to `compute_dtype` to match the kernel's MXU precision --
# folding BN into the linear weights is mathematically identical to
# Linear -> BatchNorm(eval) -> ...).
# ----------------------------------------------------------------------------
def forward_reference(params, feat, coord, reference_index, groups,
                      compute_dtype=jnp.bfloat16):
    C = feat.shape[1]
    G = groups
    I = C // G

    def mm(a, b):
        return jnp.dot(a.astype(compute_dtype), b.astype(compute_dtype),
                       preferred_element_type=jnp.float32)

    sq, tq = _fold_bn(*params["bn_q"])
    sk, tk = _fold_bn(*params["bn_k"])
    sp, tp = _fold_bn(*params["bn_p"])
    swe, twe = _fold_bn(*params["bn_we"])

    q = jax.nn.relu(mm(feat, params["wq"] * sq) + (params["bq"] * sq + tq))
    k = jax.nn.relu(mm(feat, params["wk"] * sk) + (params["bk"] * sk + tk))
    v = mm(feat, params["wv"]) + params["bv"]
    # k / v are stored (and gathered) in compute_dtype by the kernel path.
    k = k.astype(compute_dtype).astype(jnp.float32)
    v = v.astype(compute_dtype).astype(jnp.float32)

    idx = reference_index
    idx_safe = jnp.where(idx < 0, 0, idx)
    pos = coord[idx_safe] - coord[:, None, :]
    key = k[idx_safe]
    value = v[idx_safe]

    relation_qk = key - q[:, None, :]
    # pe-bias layer 1 is K=3 -> stays f32 (matches the kernel's VPU FMAs).
    peb = jax.nn.relu(pos @ (params["wp1"] * sp) + (params["bp1"] * sp + tp))
    peb = mm(peb, params["wp2"]) + params["bp2"]
    relation_qk = relation_qk + peb
    value = value + peb

    w = jax.nn.relu(mm(relation_qk, params["wwe1"] * swe)
                    + (params["bwe1"] * swe + twe))
    w = mm(w, params["wwe2"]) + params["bwe2"]
    w = jax.nn.softmax(w, axis=1)                       # softmax over neighbours
    mask = jnp.sign(idx + 1).astype(jnp.float32)
    w = w * mask[:, :, None]

    value = value.reshape(value.shape[0], value.shape[1], G, I)
    out = jnp.einsum("nsgi,nsg->ngi", value, w)
    return out.reshape(out.shape[0], C)


# ----------------------------------------------------------------------------
if __name__ == "__main__":
    N, C, G, S = 1024, 32, 4, 16

    key = jax.random.PRNGKey(0)
    kp, kf, kc, ki, km = jax.random.split(key, 5)

    params = init_params(kp, C, G)
    feat = jax.random.normal(kf, (N, C), jnp.float32)
    coord = jax.random.uniform(kc, (N, 3), jnp.float32)
    idx = jax.random.randint(ki, (N, S), 0, N)
    pad = jax.random.uniform(km, (N, S)) < 0.15            # some -1 padding entries
    reference_index = jnp.where(pad, -1, idx).astype(jnp.int32)

    out = grouped_vector_attention(params, feat, coord, reference_index, groups=G)
    out = jax.block_until_ready(out)

    ref = forward_reference(params, feat, coord, reference_index, G,
                            compute_dtype=jnp.bfloat16)
    assert out.shape == (N, C)
    assert bool(jnp.allclose(out, ref, atol=2e-2, rtol=2e-2)), \
        float(jnp.max(jnp.abs(out - ref)))
    print("KERNEL_OK")
</pallas_src>

<mosaic_0001>
module attributes {stable_mosaic.version = 11 : i64} {
  func.func @qkv_kernel(%arg0: i32, %arg1: memref<256x32xf32, #tpu.memory_space<vmem>>, %arg2: memref<32x96xbf16, #tpu.memory_space<vmem>>, %arg3: memref<1x96xf32, #tpu.memory_space<vmem>>, %arg4: memref<256x32xf32, #tpu.memory_space<vmem>>, %arg5: memref<256x64xbf16, #tpu.memory_space<vmem>>) attributes {dimension_semantics = [#tpu.dimension_semantics<parallel>], iteration_bounds = array<i64: 4>, scalar_prefetch = 0 : i64, scratch_operands = 0 : i64, tpu.core_type = #tpu.core_type<tc>, window_params = [{transform_indices = @transform_0, window_bounds = array<i64: 256, 32>}, {pipeline_mode = #tpu.pipeline_mode<synchronous>, transform_indices = @transform_1, window_bounds = array<i64: 32, 96>}, {pipeline_mode = #tpu.pipeline_mode<synchronous>, transform_indices = @transform_2, window_bounds = array<i64: 1, 96>}, {transform_indices = @transform_3, window_bounds = array<i64: 256, 32>}, {transform_indices = @transform_4, window_bounds = array<i64: 256, 64>}]} {
    %c0 = arith.constant 0 : index
    %c0_0 = arith.constant 0 : index
    %0 = vector.load %arg1[%c0, %c0_0] : memref<256x32xf32, #tpu.memory_space<vmem>>, vector<256x32xf32>
    %1 = arith.truncf %0 : vector<256x32xf32> to vector<256x32xbf16>
    %c0_1 = arith.constant 0 : index
    %c0_2 = arith.constant 0 : index
    %2 = vector.load %arg2[%c0_1, %c0_2] : memref<32x96xbf16, #tpu.memory_space<vmem>>, vector<32x96xbf16>
    %cst = arith.constant dense<0.000000e+00> : vector<256x96xf32>
    %3 = tpu.matmul %1, %2, %cst {dimension_numbers = #tpu.dot_dimension_numbers<[1], [0], [0], [1], [0, 0, 1, 1], [], []>} : vector<256x32xbf16>, vector<32x96xbf16>, vector<256x96xf32> -> vector<256x96xf32>
    %c0_3 = arith.constant 0 : index
    %c0_4 = arith.constant 0 : index
    %4 = vector.load %arg3[%c0_3, %c0_4] : memref<1x96xf32, #tpu.memory_space<vmem>>, vector<1x96xf32>
    %5 = vector.broadcast %4 : vector<1x96xf32> to vector<256x96xf32>
    %6 = arith.addf %3, %5 : vector<256x96xf32>
    %7 = vector.extract_strided_slice %6 {offsets = [0, 0], sizes = [256, 32], strides = [1, 1]} : vector<256x96xf32> to vector<256x32xf32>
    %cst_5 = arith.constant 0.000000e+00 : f32
    %8 = vector.broadcast %cst_5 : f32 to vector<256x32xf32>
    %9 = arith.maximumf %7, %8 : vector<256x32xf32>
    %c0_6 = arith.constant 0 : index
    %c0_7 = arith.constant 0 : index
    %10 = vector.load %arg4[%c0_6, %c0_7] : memref<256x32xf32, #tpu.memory_space<vmem>>, vector<256x32xf32>
    tpu.vector_store %arg4[%c0_6, %c0_7], %9 {strides = array<i32>} : memref<256x32xf32, #tpu.memory_space<vmem>>, vector<256x32xf32>,
    %11 = vector.extract_strided_slice %6 {offsets = [0, 32], sizes = [256, 32], strides = [1, 1]} : vector<256x96xf32> to vector<256x32xf32>
    %cst_8 = arith.constant 0.000000e+00 : f32
    %12 = vector.broadcast %cst_8 : f32 to vector<256x32xf32>
    %13 = arith.maximumf %11, %12 : vector<256x32xf32>
    %14 = arith.truncf %13 : vector<256x32xf32> to vector<256x32xbf16>
    %c0_9 = arith.constant 0 : index
    %c0_10 = arith.constant 0 : index
    %15 = vector.load %arg5[%c0_9, %c0_10] : memref<256x64xbf16, #tpu.memory_space<vmem>>, vector<256x32xbf16>
    tpu.vector_store %arg5[%c0_9, %c0_10], %14 {strides = array<i32>} : memref<256x64xbf16, #tpu.memory_space<vmem>>, vector<256x32xbf16>,
    %16 = vector.extract_strided_slice %6 {offsets = [0, 64], sizes = [256, 32], strides = [1, 1]} : vector<256x96xf32> to vector<256x32xf32>
    %17 = arith.truncf %16 : vector<256x32xf32> to vector<256x32xbf16>
    %c0_11 = arith.constant 0 : index
    %c32 = arith.constant 32 : index
    %18 = vector.load %arg5[%c0_11, %c32] : memref<256x64xbf16, #tpu.memory_space<vmem>>, vector<256x32xbf16>
    tpu.vector_store %arg5[%c0_11, %c32], %17 {strides = array<i32>} : memref<256x64xbf16, #tpu.memory_space<vmem>>, vector<256x32xbf16>,
    return
  }
  func.func @transform_0(%arg0: i32) -> (i32, i32) {
    %c0_i32 = arith.constant 0 : i32
    %c0_i32_0 = arith.constant 0 : i32
    return %arg0, %c0_i32 : i32, i32
  }
  func.func @transform_1(%arg0: i32) -> (i32, i32) {
    %c0_i32 = arith.constant 0 : i32
    %c0_i32_0 = arith.constant 0 : i32
    %c0_i32_1 = arith.constant 0 : i32
    return %c0_i32, %c0_i32_0 : i32, i32
  }
  func.func @transform_2(%arg0: i32) -> (i32, i32) {
    %c0_i32 = arith.constant 0 : i32
    %c0_i32_0 = arith.constant 0 : i32
    %c0_i32_1 = arith.constant 0 : i32
    return %c0_i32, %c0_i32_0 : i32, i32
  }
  func.func @transform_3(%arg0: i32) -> (i32, i32) {
    %c0_i32 = arith.constant 0 : i32
    %c0_i32_0 = arith.constant 0 : i32
    return %arg0, %c0_i32 : i32, i32
  }
  func.func @transform_4(%arg0: i32) -> (i32, i32) {
    %c0_i32 = arith.constant 0 : i32
    %c0_i32_0 = arith.constant 0 : i32
    return %arg0, %c0_i32 : i32, i32
  }
}

</mosaic_0001>

<llo_original>
// kernel: tpu_custom_call.1
$region0: #{tpu_custom_call.1}
  #allocation0 [shape = 'u32[]', space=smem, size = 0x4, offset = 0x4, fixed_abs, tag = 'smem constant byte address 0x4 - core index']
  #allocation1 [shape = 'u32[144,128]{1,0:T(1,128)}', space=vmem, size = 0x12000, scoped, tag = 'internal scratch']
  %s0 = inlined_call_operand.vmem [shape: f32[1024,32], index: 0, kind: input, shape index: {}]
  %s1 = inlined_call_operand.vmem [shape: bf16[32,96], index: 1, kind: input, shape index: {}]
  %s2 = inlined_call_operand.vmem [shape: f32[1,96], index: 2, kind: input, shape index: {}]
  %s3 = inlined_call_operand.vmem [shape: f32[1024,32], index: 3, kind: output, shape index: {0}]
  %s4 = inlined_call_operand.vmem [shape: bf16[1024,64], index: 4, kind: output, shape index: {1}]
  %5 = xla_tuple %s3, %s4
  %s6 = sld [smem:[#allocation0]]
  $region53: #{tpu_custom_call.1} parent=0
    _
  %s8 = ssub.s32 1, %s6
  %s9 = scalar_select 0, %s8, %s6
  loop: start=0, step=1, limit=6
  $region2: #{tpu_custom_call.1} parent=0 // loop_pre_header
    _
  $region3: #{tpu_custom_call.1} parent=0 // loop_header
    %s11 = sphi 0, %s15
    %p12 = scmp.ge.s32.totalorder %s11, 6
    %s21 = sphi 0, %s23
    %s24 = sphi 0, %s21
    %s25 = sphi 0, %s24
    %s41 = sphi 0, %s25
    %s45 = sphi 0, %s45
    %s47 = sphi 0, %s45
    %s48 = sphi 0, %s47
    %s62 = sphi 0, %s48
    %s66 = sphi 0, %s66
    %s68 = sphi 0, %s66
    %s69 = sphi 0, %s68
    %s83 = sphi 0, %s69
    %s89 = sphi 0, %s91
    %s92 = sphi 0, %s89
    %s93 = sphi 0, %s92
    %s109 = sphi 0, %s93
    %s115 = sphi 0, %s117
    %s118 = sphi 0, %s115
    %s119 = sphi 0, %s118
    %s135 = sphi 0, %s119
  $region4: #{tpu_custom_call.1} parent=0 // loop_header_branch
    %14 = sbr.rel (%p12) target = $region8
  $region5: #{tpu_custom_call.1} parent=0 // loop_body
    %s16 = ssub.s32 %s11, 1
    %s17 = ssub.s32 %s11, 2
    %s18 = sadd.s32 %s11, 1
    %s19 = ssub.s32 %s11, %s18
    %p20 = scmp.eq.s32.totalorder %s19, 0
    %s22 = sadd.s32 %s21, 1
    %s23 = scalar_select %p20, %s21, %s22
    %p26 = pneg %p20
    %p27 = scmp.eq.s32.totalorder %s11, 3
    %p28 = por %p26, %p27
    %p29 = scmp.ne.s32.totalorder %s21, %s24
    %p30 = scmp.eq.s32.totalorder %s11, 0
    %p31 = por %p29, %p30
    %p32 = scmp.ne.s32.totalorder %s21, %s24
    %p33 = scmp.eq.s32.totalorder %s16, 3
    %p34 = por %p32, %p33
    %p35 = scmp.ne.s32.totalorder %s24, %s25
    %p36 = scmp.eq.s32.totalorder %s16, 0
    %p37 = por %p35, %p36
    %p38 = scmp.ne.s32.totalorder %s24, %s25
    %p39 = scmp.eq.s32.totalorder %s17, 3
    %p40 = por %p38, %p39
    %p42 = scmp.ne.s32.totalorder %s25, %s41
    %p43 = scmp.eq.s32.totalorder %s17, 0
    %p44 = por %p42, %p43
    %s46 = sadd.s32 %s45, 1
    %p49 = scmp.eq.s32.totalorder %s11, 3
    %p50 = scmp.ne.s32.totalorder %s45, %s47
    %p51 = scmp.eq.s32.totalorder %s11, 0
    %p52 = por %p50, %p51
    %p53 = scmp.ne.s32.totalorder %s45, %s47
    %p54 = scmp.eq.s32.totalorder %s16, 3
    %p55 = por %p53, %p54
    %p56 = scmp.ne.s32.totalorder %s47, %s48
    %p57 = scmp.eq.s32.totalorder %s16, 0
    %p58 = por %p56, %p57
    %p59 = scmp.ne.s32.totalorder %s47, %s48
    %p60 = scmp.eq.s32.totalorder %s17, 3
    %p61 = por %p59, %p60
    %p63 = scmp.ne.s32.totalorder %s48, %s62
    %p64 = scmp.eq.s32.totalorder %s17, 0
    %p65 = por %p63, %p64
    %s67 = sadd.s32 %s66, 1
    %p70 = scmp.eq.s32.totalorder %s11, 3
    %p71 = scmp.ne.s32.totalorder %s66, %s68
    %p72 = scmp.eq.s32.totalorder %s11, 0
    %p73 = por %p71, %p72
    %p74 = scmp.ne.s32.totalorder %s66, %s68
    %p75 = scmp.eq.s32.totalorder %s16, 3
    %p76 = por %p74, %p75
    %p77 = scmp.ne.s32.totalorder %s68, %s69
    %p78 = scmp.eq.s32.totalorder %s16, 0
    %p79 = por %p77, %p78
    %p80 = scmp.ne.s32.totalorder %s68, %s69
    %p81 = scmp.eq.s32.totalorder %s17, 3
    %p82 = por %p80, %p81
    %p84 = scmp.ne.s32.totalorder %s69, %s83
    %p85 = scmp.eq.s32.totalorder %s17, 0
    %p86 = por %p84, %p85
    %s87 = ssub.s32 %s11, %s18
    %p88 = scmp.eq.s32.totalorder %s87, 0
    %s90 = sadd.s32 %s89, 1
    %s91 = scalar_select %p88, %s89, %s90
    %p94 = pneg %p88
    %p95 = scmp.eq.s32.totalorder %s11, 3
    %p96 = por %p94, %p95
    %p97 = scmp.ne.s32.totalorder %s89, %s92
    %p98 = scmp.eq.s32.totalorder %s11, 0
    %p99 = por %p97, %p98
    %p100 = scmp.ne.s32.totalorder %s89, %s92
    %p101 = scmp.eq.s32.totalorder %s16, 3
    %p102 = por %p100, %p101
    %p103 = scmp.ne.s32.totalorder %s92, %s93
    %p104 = scmp.eq.s32.totalorder %s16, 0
    %p105 = por %p103, %p104
    %p106 = scmp.ne.s32.totalorder %s92, %s93
    %p107 = scmp.eq.s32.totalorder %s17, 3
    %p108 = por %p106, %p107
    %p110 = scmp.ne.s32.totalorder %s93, %s109
    %p111 = scmp.eq.s32.totalorder %s17, 0
    %p112 = por %p110, %p111
    %s113 = ssub.s32 %s11, %s18
    %p114 = scmp.eq.s32.totalorder %s113, 0
    %s116 = sadd.s32 %s115, 1
    %s117 = scalar_select %p114, %s115, %s116
    %p120 = pneg %p114
    %p121 = scmp.eq.s32.totalorder %s11, 3
    %p122 = por %p120, %p121
    %p123 = scmp.ne.s32.totalorder %s115, %s118
    %p124 = scmp.eq.s32.totalorder %s11, 0
    %p125 = por %p123, %p124
    %p126 = scmp.ne.s32.totalorder %s115, %s118
    %p127 = scmp.eq.s32.totalorder %s16, 3
    %p128 = por %p126, %p127
    %p129 = scmp.ne.s32.totalorder %s118, %s119
    %p130 = scmp.eq.s32.totalorder %s16, 0
    %p131 = por %p129, %p130
    %p132 = scmp.ne.s32.totalorder %s118, %s119
    %p133 = scmp.eq.s32.totalorder %s17, 3
    %p134 = por %p132, %p133
    %p136 = scmp.ne.s32.totalorder %s119, %s135
    %p137 = scmp.eq.s32.totalorder %s17, 0
    %p138 = por %p136, %p137
    %p139 = scmp.le.s32.totalorder 1, %s11
    %p140 = scmp.lt.s32.totalorder %s11, 5
    %p141 = pnand %p139, %p140
    %p142 = pneg %p141
    // Predicated region
    $region9: #{tpu_custom_call.1} parent=5 // pred_check
      _
    $region10: #{tpu_custom_call.1} parent=5 // pred_check_branch
      %144 = sbr.rel (%p141) target = $region12
    $region11: #{tpu_custom_call.1} parent=5 // pred_region
      %s145 = ssub.s32 %s11, 1
      // Predicated region
      $region13: #{tpu_custom_call.1} parent=11 // pred_check
        %p146 = pneg %p58
      $region14: #{tpu_custom_call.1} parent=11 // pred_check_branch
        %148 = sbr.rel (%p146) target = $region16
      $region15: #{tpu_custom_call.1} parent=11 // pred_region
        _
      $region16: #{tpu_custom_call.1} parent=11 // pred_fallthru
        _
      // Predicated region
      $region17: #{tpu_custom_call.1} parent=11 // pred_check
        %p149 = pneg %p79
      $region18: #{tpu_custom_call.1} parent=11 // pred_check_branch
        %151 = sbr.rel (%p149) target = $region20
      $region19: #{tpu_custom_call.1} parent=11 // pred_region
        _
      $region20: #{tpu_custom_call.1} parent=11 // pred_fallthru
        _
    $region12: #{tpu_custom_call.1} parent=5 // pred_fallthru
      _
    %p152 = scmp.lt.s32.totalorder %s11, 4
    // Predicated region
    $region21: #{tpu_custom_call.1} parent=5 // pred_check
      %p153 = pneg %p152
    $region22: #{tpu_custom_call.1} parent=5 // pred_check_branch
      %155 = sbr.rel (%p153) target = $region24
    $region23: #{tpu_custom_call.1} parent=5 // pred_region
      // Predicated region
      $region25: #{tpu_custom_call.1} parent=23 // pred_check
        %p156 = pneg %p31
      $region26: #{tpu_custom_call.1} parent=23 // pred_check_branch
        %158 = sbr.rel (%p156) target = $region28
      $region27: #{tpu_custom_call.1} parent=23 // pred_region
        %s159 = smul.u32 32, %s11
        %p160 = scmp.lt.s32.totalorder %s159, 127
        %s161 = scalar_select %p160, %s159, 127
        %s162 = smul.addr %s161, 8
        %s163 = scalar_lea.vmem %s0, %s162
        %s164 = smul.u32 32, %s11
      $region28: #{tpu_custom_call.1} parent=23 // pred_fallthru
        _
    $region24: #{tpu_custom_call.1} parent=5 // pred_fallthru
      _
    %p165 = scmp.le.s32.totalorder 1, %s11
    %p166 = scmp.lt.s32.totalorder %s11, 5
    %p167 = pnand %p165, %p166
    %p168 = pneg %p167
    // Predicated region
    $region29: #{tpu_custom_call.1} parent=5 // pred_check
      _
    $region30: #{tpu_custom_call.1} parent=5 // pred_check_branch
      %170 = sbr.rel (%p167) target = $region32
    $region31: #{tpu_custom_call.1} parent=5 // pred_region
      %s171 = ssub.s32 %s11, 1
      %s172 = smul.u32 32, %s16
      %p173 = scmp.lt.s32.totalorder %s172, 127
      %s174 = scalar_select %p173, %s172, 127
      %s175 = smul.addr %s174, 8
      %s176 = scalar_lea.vmem %s0, %s175
      %p177 = pneg %p37
      %p178 = pneg %p34
      %p179 = pneg %p58
      %p180 = pneg %p55
      %p181 = pneg %p79
      %p182 = pneg %p76
      %p183 = pneg %p105
      %p184 = pneg %p102
      %s185 = smul.u32 32, %s16
      %p186 = scmp.lt.s32.totalorder %s185, 127
      %s187 = scalar_select %p186, %s185, 127
      %s188 = smul.addr %s187, 8
      %s189 = scalar_lea.vmem %s3, %s188
      %p190 = pneg %p131
      %p191 = pneg %p128
      %s192 = smul.u32 32, %s16
      %p193 = scmp.lt.s32.totalorder %s192, 127
      %s194 = scalar_select %p193, %s192, 127
      %s195 = smul.addr %s194, 4
      %s196 = scalar_lea.vmem %s4, %s195
      %s197 = smul.u32 32, %s16
      %p198 = scmp.lt.s32.totalorder %s197, 127
      %s199 = scalar_select %p198, %s197, 127
      %s200 = smul.addr %s199, 8
      %s201 = scalar_lea.vmem %s0, %s200
      %s202 = smul.u32 32, %s16
      %s203 = smul.u32 32, %s16
      %p204 = scmp.lt.s32.totalorder %s203, 127
      %s205 = scalar_select %p204, %s203, 127
      %s206 = smul.addr %s205, 8
      %s207 = scalar_lea.vmem %s3, %s206
      %s208 = smul.u32 32, %s16
      %s209 = smul.u32 32, %s16
      %p210 = scmp.lt.s32.totalorder %s209, 127
      %s211 = scalar_select %p210, %s209, 127
      %s212 = smul.addr %s211, 4
      %s213 = scalar_lea.vmem %s4, %s212
      %s214 = smul.u32 32, %s16
      %v216 = vld [vmem:[%s201] sm:$0xff]
      %v217 = vld [vmem:[%s201 + $0x8] sm:$0xff]
      %v218 = vld [vmem:[%s201 + $0x10] sm:$0xff]
      %v219 = vld [vmem:[%s201 + $0x18] sm:$0xff]
      %v220 = vld [vmem:[%s201 + $0x20] sm:$0xff]
      %v221 = vld [vmem:[%s201 + $0x28] sm:$0xff]
      %v222 = vld [vmem:[%s201 + $0x30] sm:$0xff]
      %v223 = vld [vmem:[%s201 + $0x38] sm:$0xff]
      %v224 = vld [vmem:[%s201 + $0x40] sm:$0xff]
      %v225 = vld [vmem:[%s201 + $0x48] sm:$0xff]
      %v226 = vld [vmem:[%s201 + $0x50] sm:$0xff]
      %v227 = vld [vmem:[%s201 + $0x58] sm:$0xff]
      %v228 = vld [vmem:[%s201 + $0x60] sm:$0xff]
      %v229 = vld [vmem:[%s201 + $0x68] sm:$0xff]
      %v230 = vld [vmem:[%s201 + $0x70] sm:$0xff]
      %v231 = vld [vmem:[%s201 + $0x78] sm:$0xff]
      %v232 = vld [vmem:[%s201 + $0x80] sm:$0xff]
      %v233 = vld [vmem:[%s201 + $0x88] sm:$0xff]
      %v234 = vld [vmem:[%s201 + $0x90] sm:$0xff]
      %v235 = vld [vmem:[%s201 + $0x98] sm:$0xff]
      %v236 = vld [vmem:[%s201 + $0xa0] sm:$0xff]
      %v237 = vld [vmem:[%s201 + $0xa8] sm:$0xff]
      %v238 = vld [vmem:[%s201 + $0xb0] sm:$0xff]
      %v239 = vld [vmem:[%s201 + $0xb8] sm:$0xff]
      %v240 = vld [vmem:[%s201 + $0xc0] sm:$0xff]
      %v241 = vld [vmem:[%s201 + $0xc8] sm:$0xff]
      %v242 = vld [vmem:[%s201 + $0xd0] sm:$0xff]
      %v243 = vld [vmem:[%s201 + $0xd8] sm:$0xff]
      %v244 = vld [vmem:[%s201 + $0xe0] sm:$0xff]
      %v245 = vld [vmem:[%s201 + $0xe8] sm:$0xff]
      %v246 = vld [vmem:[%s201 + $0xf0] sm:$0xff]
      %v247 = vld [vmem:[%s201 + $0xf8] sm:$0xff]
      %v248 = vpack.c.bf16 %v217, %v216
      %v249 = vpack.c.bf16 %v219, %v218
      %v250 = vpack.c.bf16 %v221, %v220
      %v251 = vpack.c.bf16 %v223, %v222
      %v252 = vpack.c.bf16 %v225, %v224
      %v253 = vpack.c.bf16 %v227, %v226
      %v254 = vpack.c.bf16 %v229, %v228
      %v255 = vpack.c.bf16 %v231, %v230
      %v256 = vpack.c.bf16 %v233, %v232
      %v257 = vpack.c.bf16 %v235, %v234
      %v258 = vpack.c.bf16 %v237, %v236
      %v259 = vpack.c.bf16 %v239, %v238
      %v260 = vpack.c.bf16 %v241, %v240
      %v261 = vpack.c.bf16 %v243, %v242
      %v262 = vpack.c.bf16 %v245, %v244
      %v263 = vpack.c.bf16 %v247, %v246
      %v264 = vld [vmem:[%s1] sm:$0xf]
      %v265 = vld [vmem:[%s1 + $0x4] sm:$0xf]
      %v266 = vld [vmem:[%s1 + $0x8] sm:$0xf]
      %v267 = vld [vmem:[%s1 + $0xc] sm:$0xf]
      %v268 = vld [vmem:[%s2] sm:$0x1]
      %v270 = vlaneseq
      %v271 = vshrl.u32 %v270, 7
      %v272 = vsub.s32 0, %v271
      %v273 = vrot.slane %v268, %v272
      %v279 = vunpack.c.l.b16 %v264
      %v280 = vunpack.c.l.b16 %v265
      %v281 = vunpack.c.l.b16 %v266
      %v282 = vunpack.c.l.b16 %v267
      %v283 = vpack.c.b16 %v280, %v279
      %v284 = vpack.c.b16 %v282, %v281
      %vm287 = vcmask 261120
      %v289 = vsel %vm287, %v248, 0
      %v292 = vsel %vm287, %v249, 0
      %v295 = vsel %vm287, %v250, 0
      %v298 = vsel %vm287, %v251, 0
      %v301 = vsel %vm287, %v252, 0
      %v304 = vsel %vm287, %v253, 0
      %v307 = vsel %vm287, %v254, 0
      %v310 = vsel %vm287, %v255, 0
      %v313 = vsel %vm287, %v256, 0
      %v316 = vsel %vm287, %v257, 0
      %v319 = vsel %vm287, %v258, 0
      %v322 = vsel %vm287, %v259, 0
      %v325 = vsel %vm287, %v260, 0
      %v328 = vsel %vm287, %v261, 0
      %v331 = vsel %vm287, %v262, 0
      %v334 = vsel %vm287, %v263, 0
      %336 = vmatprep.subr.bf16.mxu0 0
      %337 = vmatpush1.bf16.msra.mxu0 %v283
      %338 = vmatprep.subr.bf16.mxu0 0
      %339 = vmatpush1.bf16.msra.mxu0 %v284
      %340 = vmatprep.subr.bf16.mxu0 0
      %341 = vmatpush1.bf16.msra.mxu0 0
      %342 = vmatprep.subr.bf16.mxu0 0
      %343 = vmatpush1.bf16.msra.mxu0 0
      %344 = vmatprep.subr.bf16.mxu0 0
      %345 = vmatpush1.bf16.msra.mxu0 0
      %346 = vmatprep.subr.bf16.mxu0 0
      %347 = vmatpush1.bf16.msra.mxu0 0
      %348 = vmatprep.subr.bf16.mxu0 0
      %349 = vmatpush1.bf16.msra.mxu0 0
      %350 = vmatprep.subr.bf16.mxu0 0
      %351 = vmatpush1.bf16.msra.mxu0 0
      %352 = vmatprep.subr.bf16.mxu0 0
      %353 = vmatpush1.bf16.msra.mxu0 0
      %354 = vmatprep.subr.bf16.mxu0 0
      %355 = vmatpush1.bf16.msra.mxu0 0
      %356 = vmatprep.subr.bf16.mxu0 0
      %357 = vmatpush1.bf16.msra.mxu0 0
      %358 = vmatprep.subr.bf16.mxu0 0
      %359 = vmatpush1.bf16.msra.mxu0 0
      %360 = vmatprep.subr.bf16.mxu0 0
      %361 = vmatpush1.bf16.msra.mxu0 0
      %362 = vmatprep.subr.bf16.mxu0 0
      %363 = vmatpush1.bf16.msra.mxu0 0
      %364 = vmatprep.subr.bf16.mxu0 0
      %365 = vmatpush1.bf16.msra.mxu0 0
      %366 = vmatprep.subr.bf16.mxu0 0
      %367 = vmatpush1.bf16.msra.mxu0 0
      %368 = vmatprep.mubr.bf16.mxu0 0
      %369 = vmatmul.mubr.bf16.gmra.mrb[0].mxu0 %v289
      %v370 = vpop.f32.mrb[0].mxu0
      %v371 = vadd.f32 %v273, %v370
      %v372 = vpop.f32.mrb[0].mxu0
      %v373 = vpop.f32.mrb[0].mxu0
      %v374 = vadd.f32 %v273, %v373
      %v375 = vpop.f32.mrb[0].mxu0
      %376 = vmatprep.mubr.bf16.mxu0 0
      %377 = vmatmul.mubr.bf16.gmra.mrb[0].mxu0 %v292
      %v378 = vpop.f32.mrb[0].mxu0
      %v379 = vadd.f32 %v273, %v378
      %v380 = vpop.f32.mrb[0].mxu0
      %v381 = vpop.f32.mrb[0].mxu0
      %v382 = vadd.f32 %v273, %v381
      %v383 = vpop.f32.mrb[0].mxu0
      %384 = vmatprep.mubr.bf16.mxu0 0
      %385 = vmatmul.mubr.bf16.gmra.mrb[0].mxu0 %v295
      %v386 = vpop.f32.mrb[0].mxu0
      %v387 = vadd.f32 %v273, %v386
      %v388 = vpop.f32.mrb[0].mxu0
      %v389 = vpop.f32.mrb[0].mxu0
      %v390 = vadd.f32 %v273, %v389
      %v391 = vpop.f32.mrb[0].mxu0
      %392 = vmatprep.mubr.bf16.mxu0 0
      %393 = vmatmul.mubr.bf16.gmra.mrb[0].mxu0 %v298
      %v394 = vpop.f32.mrb[0].mxu0
      %v395 = vadd.f32 %v273, %v394
      %v396 = vpop.f32.mrb[0].mxu0
      %v397 = vpop.f32.mrb[0].mxu0
      %v398 = vadd.f32 %v273, %v397
      %v399 = vpop.f32.mrb[0].mxu0
      %400 = vmatprep.mubr.bf16.mxu0 0
      %401 = vmatmul.mubr.bf16.gmra.mrb[0].mxu0 %v301
      %v402 = vpop.f32.mrb[0].mxu0
      %v403 = vadd.f32 %v273, %v402
      %v404 = vpop.f32.mrb[0].mxu0
      %v405 = vpop.f32.mrb[0].mxu0
      %v406 = vadd.f32 %v273, %v405
      %v407 = vpop.f32.mrb[0].mxu0
      %408 = vmatprep.mubr.bf16.mxu0 0
      %409 = vmatmul.mubr.bf16.gmra.mrb[0].mxu0 %v304
      %v410 = vpop.f32.mrb[0].mxu0
      %v411 = vadd.f32 %v273, %v410
      %v412 = vpop.f32.mrb[0].mxu0
      %v413 = vpop.f32.mrb[0].mxu0
      %v414 = vadd.f32 %v273, %v413
      %v415 = vpop.f32.mrb[0].mxu0
      %416 = vmatprep.mubr.bf16.mxu0 0
      %417 = vmatmul.mubr.bf16.gmra.mrb[0].mxu0 %v307
      %v418 = vpop.f32.mrb[0].mxu0
      %v419 = vadd.f32 %v273, %v418
      %v420 = vpop.f32.mrb[0].mxu0
      %v421 = vpop.f32.mrb[0].mxu0
      %v422 = vadd.f32 %v273, %v421
      %v423 = vpop.f32.mrb[0].mxu0
      %424 = vmatprep.mubr.bf16.mxu0 0
      %425 = vmatmul.mubr.bf16.gmra.mrb[0].mxu0 %v310
      %v426 = vpop.f32.mrb[0].mxu0
      %v427 = vadd.f32 %v273, %v426
      %v428 = vpop.f32.mrb[0].mxu0
      %v429 = vpop.f32.mrb[0].mxu0
      %v430 = vadd.f32 %v273, %v429
      %v431 = vpop.f32.mrb[0].mxu0
      %432 = vmatprep.mubr.bf16.mxu0 0
      %433 = vmatmul.mubr.bf16.gmra.mrb[0].mxu0 %v313
      %v434 = vpop.f32.mrb[0].mxu0
      %v435 = vadd.f32 %v273, %v434
      %v436 = vpop.f32.mrb[0].mxu0
      %v437 = vpop.f32.mrb[0].mxu0
      %v438 = vadd.f32 %v273, %v437
      %v439 = vpop.f32.mrb[0].mxu0
      %440 = vmatprep.mubr.bf16.mxu0 0
      %441 = vmatmul.mubr.bf16.gmra.mrb[0].mxu0 %v316
      %v442 = vpop.f32.mrb[0].mxu0
      %v443 = vadd.f32 %v273, %v442
      %v444 = vpop.f32.mrb[0].mxu0
      %v445 = vpop.f32.mrb[0].mxu0
      %v446 = vadd.f32 %v273, %v445
      %v447 = vpop.f32.mrb[0].mxu0
      %448 = vmatprep.mubr.bf16.mxu0 0
      %449 = vmatmul.mubr.bf16.gmra.mrb[0].mxu0 %v319
      %v450 = vpop.f32.mrb[0].mxu0
      %v451 = vadd.f32 %v273, %v450
      %v452 = vpop.f32.mrb[0].mxu0
      %v453 = vpop.f32.mrb[0].mxu0
      %v454 = vadd.f32 %v273, %v453
      %v455 = vpop.f32.mrb[0].mxu0
      %456 = vmatprep.mubr.bf16.mxu0 0
      %457 = vmatmul.mubr.bf16.gmra.mrb[0].mxu0 %v322
      %v458 = vpop.f32.mrb[0].mxu0
      %v459 = vadd.f32 %v273, %v458
      %v460 = vpop.f32.mrb[0].mxu0
      %v461 = vpop.f32.mrb[0].mxu0
      %v462 = vadd.f32 %v273, %v461
      %v463 = vpop.f32.mrb[0].mxu0
      %464 = vmatprep.mubr.bf16.mxu0 0
      %465 = vmatmul.mubr.bf16.gmra.mrb[0].mxu0 %v325
      %v466 = vpop.f32.mrb[0].mxu0
      %v467 = vadd.f32 %v273, %v466
      %v468 = vpop.f32.mrb[0].mxu0
      %v469 = vpop.f32.mrb[0].mxu0
      %v470 = vadd.f32 %v273, %v469
      %v471 = vpop.f32.mrb[0].mxu0
      %472 = vmatprep.mubr.bf16.mxu0 0
      %473 = vmatmul.mubr.bf16.gmra.mrb[0].mxu0 %v328
      %v474 = vpop.f32.mrb[0].mxu0
      %v475 = vadd.f32 %v273, %v474
      %v476 = vpop.f32.mrb[0].mxu0
      %v477 = vpop.f32.mrb[0].mxu0
      %v478 = vadd.f32 %v273, %v477
      %v479 = vpop.f32.mrb[0].mxu0
      %480 = vmatprep.mubr.bf16.mxu0 0
      %481 = vmatmul.mubr.bf16.gmra.mrb[0].mxu0 %v331
      %v482 = vpop.f32.mrb[0].mxu0
      %v483 = vadd.f32 %v273, %v482
      %v484 = vpop.f32.mrb[0].mxu0
      %v485 = vpop.f32.mrb[0].mxu0
      %v486 = vadd.f32 %v273, %v485
      %v487 = vpop.f32.mrb[0].mxu0
      %488 = vmatprep.mubr.bf16.mxu0 0
      %489 = vmatmul.mubr.bf16.gmra.mrb[0].mxu0 %v334
      %v490 = vpop.f32.mrb[0].mxu0
      %v491 = vadd.f32 %v273, %v490
      %v492 = vpop.f32.mrb[0].mxu0
      %v493 = vpop.f32.mrb[0].mxu0
      %v494 = vadd.f32 %v273, %v493
      %v495 = vpop.f32.mrb[0].mxu0
      %496 = vdwg.mxu0
      %v497 = vmax.f32 %v371, 0.0
      %v498 = vmax.f32 %v374, 0.0
      %v499 = vmax.f32 %v379, 0.0
      %v500 = vmax.f32 %v382, 0.0
      %v501 = vmax.f32 %v387, 0.0
      %v502 = vmax.f32 %v390, 0.0
      %v503 = vmax.f32 %v395, 0.0
      %v504 = vmax.f32 %v398, 0.0
      %v505 = vmax.f32 %v403, 0.0
      %v506 = vmax.f32 %v406, 0.0
      %v507 = vmax.f32 %v411, 0.0
      %v508 = vmax.f32 %v414, 0.0
      %v509 = vmax.f32 %v419, 0.0
      %v510 = vmax.f32 %v422, 0.0
      %v511 = vmax.f32 %v427, 0.0
      %v512 = vmax.f32 %v430, 0.0
      %v513 = vmax.f32 %v435, 0.0
      %v514 = vmax.f32 %v438, 0.0
      %v515 = vmax.f32 %v443, 0.0
      %v516 = vmax.f32 %v446, 0.0
      %v517 = vmax.f32 %v451, 0.0
      %v518 = vmax.f32 %v454, 0.0
      %v519 = vmax.f32 %v459, 0.0
      %v520 = vmax.f32 %v462, 0.0
      %v521 = vmax.f32 %v467, 0.0
      %v522 = vmax.f32 %v470, 0.0
      %v523 = vmax.f32 %v475, 0.0
      %v524 = vmax.f32 %v478, 0.0
      %v525 = vmax.f32 %v483, 0.0
      %v526 = vmax.f32 %v486, 0.0
      %v527 = vmax.f32 %v491, 0.0
      %v528 = vmax.f32 %v494, 0.0
      %529 = vst.msk [vmem:[%s207] sm:$0xff] %vm287, %v497
      %530 = vst.msk [vmem:[%s207 + $0x8] sm:$0xff] %vm287, %v498
      %531 = vst.msk [vmem:[%s207 + $0x10] sm:$0xff] %vm287, %v499
      %532 = vst.msk [vmem:[%s207 + $0x18] sm:$0xff] %vm287, %v500
      %533 = vst.msk [vmem:[%s207 + $0x20] sm:$0xff] %vm287, %v501
      %534 = vst.msk [vmem:[%s207 + $0x28] sm:$0xff] %vm287, %v502
      %535 = vst.msk [vmem:[%s207 + $0x30] sm:$0xff] %vm287, %v503
      %536 = vst.msk [vmem:[%s207 + $0x38] sm:$0xff] %vm287, %v504
      %537 = vst.msk [vmem:[%s207 + $0x40] sm:$0xff] %vm287, %v505
      %538 = vst.msk [vmem:[%s207 + $0x48] sm:$0xff] %vm287, %v506
      %539 = vst.msk [vmem:[%s207 + $0x50] sm:$0xff] %vm287, %v507
      %540 = vst.msk [vmem:[%s207 + $0x58] sm:$0xff] %vm287, %v508
      %541 = vst.msk [vmem:[%s207 + $0x60] sm:$0xff] %vm287, %v509
      %542 = vst.msk [vmem:[%s207 + $0x68] sm:$0xff] %vm287, %v510
      %543 = vst.msk [vmem:[%s207 + $0x70] sm:$0xff] %vm287, %v511
      %544 = vst.msk [vmem:[%s207 + $0x78] sm:$0xff] %vm287, %v512
      %545 = vst.msk [vmem:[%s207 + $0x80] sm:$0xff] %vm287, %v513
      %546 = vst.msk [vmem:[%s207 + $0x88] sm:$0xff] %vm287, %v514
      %547 = vst.msk [vmem:[%s207 + $0x90] sm:$0xff] %vm287, %v515
      %548 = vst.msk [vmem:[%s207 + $0x98] sm:$0xff] %vm287, %v516
      %549 = vst.msk [vmem:[%s207 + $0xa0] sm:$0xff] %vm287, %v517
      %550 = vst.msk [vmem:[%s207 + $0xa8] sm:$0xff] %vm287, %v518
      %551 = vst.msk [vmem:[%s207 + $0xb0] sm:$0xff] %vm287, %v519
      %552 = vst.msk [vmem:[%s207 + $0xb8] sm:$0xff] %vm287, %v520
      %553 = vst.msk [vmem:[%s207 + $0xc0] sm:$0xff] %vm287, %v521
      %554 = vst.msk [vmem:[%s207 + $0xc8] sm:$0xff] %vm287, %v522
      %555 = vst.msk [vmem:[%s207 + $0xd0] sm:$0xff] %vm287, %v523
      %556 = vst.msk [vmem:[%s207 + $0xd8] sm:$0xff] %vm287, %v524
      %557 = vst.msk [vmem:[%s207 + $0xe0] sm:$0xff] %vm287, %v525
      %558 = vst.msk [vmem:[%s207 + $0xe8] sm:$0xff] %vm287, %v526
      %559 = vst.msk [vmem:[%s207 + $0xf0] sm:$0xff] %vm287, %v527
      %560 = vst.msk [vmem:[%s207 + $0xf8] sm:$0xff] %vm287, %v528
      %v561 = vpack.c.bf16 %v498, %v497
      %v562 = vpack.c.bf16 %v500, %v499
      %v563 = vpack.c.bf16 %v502, %v501
      %v564 = vpack.c.bf16 %v504, %v503
      %v565 = vpack.c.bf16 %v506, %v505
      %v566 = vpack.c.bf16 %v508, %v507
      %v567 = vpack.c.bf16 %v510, %v509
      %v568 = vpack.c.bf16 %v512, %v511
      %v569 = vpack.c.bf16 %v514, %v513
      %v570 = vpack.c.bf16 %v516, %v515
      %v571 = vpack.c.bf16 %v518, %v517
      %v572 = vpack.c.bf16 %v520, %v519
      %v573 = vpack.c.bf16 %v522, %v521
      %v574 = vpack.c.bf16 %v524, %v523
      %v575 = vpack.c.bf16 %v526, %v525
      %v576 = vpack.c.bf16 %v528, %v527
      %v593 = vunpack.c.l.b16 %v561
      %v594 = vunpack.c.h.b16 %v561
      %v595 = vunpack.c.l.b16 %v562
      %v596 = vunpack.c.h.b16 %v562
      %v597 = vunpack.c.l.b16 %v563
      %v598 = vunpack.c.h.b16 %v563
      %v599 = vunpack.c.l.b16 %v564
      %v600 = vunpack.c.h.b16 %v564
      %v601 = vunpack.c.l.b16 %v565
      %v602 = vunpack.c.h.b16 %v565
      %v603 = vunpack.c.l.b16 %v566
      %v604 = vunpack.c.h.b16 %v566
      %v605 = vunpack.c.l.b16 %v567
      %v606 = vunpack.c.h.b16 %v567
      %v607 = vunpack.c.l.b16 %v568
      %v608 = vunpack.c.h.b16 %v568
      %v609 = vunpack.c.l.b16 %v569
      %v610 = vunpack.c.h.b16 %v569
      %v611 = vunpack.c.l.b16 %v570
      %v612 = vunpack.c.h.b16 %v570
      %v613 = vunpack.c.l.b16 %v571
      %v614 = vunpack.c.h.b16 %v571
      %v615 = vunpack.c.l.b16 %v572
      %v616 = vunpack.c.h.b16 %v572
      %v617 = vunpack.c.l.b16 %v573
      %v618 = vunpack.c.h.b16 %v573
      %v619 = vunpack.c.l.b16 %v574
      %v620 = vunpack.c.h.b16 %v574
      %v621 = vunpack.c.l.b16 %v575
      %v622 = vunpack.c.h.b16 %v575
      %v623 = vunpack.c.l.b16 %v576
      %v624 = vunpack.c.h.b16 %v576
      %v625 = vpack.c.b16 %v593, %v593
      %v626 = vpack.c.b16 %v594, %v594
      %v627 = vpack.c.b16 %v595, %v595
      %v628 = vpack.c.b16 %v596, %v596
      %v629 = vpack.c.b16 %v597, %v597
      %v630 = vpack.c.b16 %v598, %v598
      %v631 = vpack.c.b16 %v599, %v599
      %v632 = vpack.c.b16 %v600, %v600
      %v633 = vpack.c.b16 %v601, %v601
      %v634 = vpack.c.b16 %v602, %v602
      %v635 = vpack.c.b16 %v603, %v603
      %v636 = vpack.c.b16 %v604, %v604
      %v637 = vpack.c.b16 %v605, %v605
      %v638 = vpack.c.b16 %v606, %v606
      %v639 = vpack.c.b16 %v607, %v607
      %v640 = vpack.c.b16 %v608, %v608
      %v641 = vpack.c.b16 %v609, %v609
      %v642 = vpack.c.b16 %v610, %v610
      %v643 = vpack.c.b16 %v611, %v611
      %v644 = vpack.c.b16 %v612, %v612
      %v645 = vpack.c.b16 %v613, %v613
      %v646 = vpack.c.b16 %v614, %v614
      %v647 = vpack.c.b16 %v615, %v615
      %v648 = vpack.c.b16 %v616, %v616
      %v649 = vpack.c.b16 %v617, %v617
      %v650 = vpack.c.b16 %v618, %v618
      %v651 = vpack.c.b16 %v619, %v619
      %v652 = vpack.c.b16 %v620, %v620
      %v653 = vpack.c.b16 %v621, %v621
      %v654 = vpack.c.b16 %v622, %v622
      %v655 = vpack.c.b16 %v623, %v623
      %v656 = vpack.c.b16 %v624, %v624
      %657 = vrot.lane.b32.xlu0 %v625, 96
      %v658 = vpop.permute.xlu0 %657
      %659 = vrot.lane.b32.xlu0 %v626, 96
      %v660 = vpop.permute.xlu0 %659
      %661 = vrot.lane.b32.xlu0 %v627, 96
      %v662 = vpop.permute.xlu0 %661
      %663 = vrot.lane.b32.xlu0 %v628, 96
      %v664 = vpop.permute.xlu0 %663
      %665 = vrot.lane.b32.xlu0 %v629, 96
      %v666 = vpop.permute.xlu0 %665
      %667 = vrot.lane.b32.xlu0 %v630, 96
      %v668 = vpop.permute.xlu0 %667
      %669 = vrot.lane.b32.xlu0 %v631, 96
      %v670 = vpop.permute.xlu0 %669
      %671 = vrot.lane.b32.xlu0 %v632, 96
      %v672 = vpop.permute.xlu0 %671
      %673 = vrot.lane.b32.xlu0 %v633, 96
      %v674 = vpop.permute.xlu0 %673
      %675 = vrot.lane.b32.xlu0 %v634, 96
      %v676 = vpop.permute.xlu0 %675
      %677 = vrot.lane.b32.xlu0 %v635, 96
      %v678 = vpop.permute.xlu0 %677
      %679 = vrot.lane.b32.xlu0 %v636, 96
      %v680 = vpop.permute.xlu0 %679
      %681 = vrot.lane.b32.xlu0 %v637, 96
      %v682 = vpop.permute.xlu0 %681
      %683 = vrot.lane.b32.xlu0 %v638, 96
      %v684 = vpop.permute.xlu0 %683
      %685 = vrot.lane.b32.xlu0 %v639, 96
      %v686 = vpop.permute.xlu0 %685
      %687 = vrot.lane.b32.xlu0 %v640, 96
      %v688 = vpop.permute.xlu0 %687
      %689 = vrot.lane.b32.xlu0 %v641, 96
      %v690 = vpop.permute.xlu0 %689
      %691 = vrot.lane.b32.xlu0 %v642, 96
      %v692 = vpop.permute.xlu0 %691
      %693 = vrot.lane.b32.xlu0 %v643, 96
      %v694 = vpop.permute.xlu0 %693
      %695 = vrot.lane.b32.xlu0 %v644, 96
      %v696 = vpop.permute.xlu0 %695
      %697 = vrot.lane.b32.xlu0 %v645, 96
      %v698 = vpop.permute.xlu0 %697
      %699 = vrot.lane.b32.xlu0 %v646, 96
      %v700 = vpop.permute.xlu0 %699
      %701 = vrot.lane.b32.xlu0 %v647, 96
      %v702 = vpop.permute.xlu0 %701
      %703 = vrot.lane.b32.xlu0 %v648, 96
      %v704 = vpop.permute.xlu0 %703
      %705 = vrot.lane.b32.xlu0 %v649, 96
      %v706 = vpop.permute.xlu0 %705
      %707 = vrot.lane.b32.xlu0 %v650, 96
      %v708 = vpop.permute.xlu0 %707
      %709 = vrot.lane.b32.xlu0 %v651, 96
      %v710 = vpop.permute.xlu0 %709
      %711 = vrot.lane.b32.xlu0 %v652, 96
      %v712 = vpop.permute.xlu0 %711
      %713 = vrot.lane.b32.xlu0 %v653, 96
      %v714 = vpop.permute.xlu0 %713
      %715 = vrot.lane.b32.xlu0 %v654, 96
      %v716 = vpop.permute.xlu0 %715
      %717 = vrot.lane.b32.xlu0 %v655, 96
      %v718 = vpop.permute.xlu0 %717
      %719 = vrot.lane.b32.xlu0 %v656, 96
      %v720 = vpop.permute.xlu0 %719
      %vm753 = vcmask 257024
      %754 = vst.msk [vmem:[%s213] sm:$0xf] %vm753, %v658
      %755 = vst.msk [vmem:[%s213 + $0x4] sm:$0xf] %vm753, %v660
      %756 = vst.msk [vmem:[%s213 + $0x8] sm:$0xf] %vm753, %v662
      %757 = vst.msk [vmem:[%s213 + $0xc] sm:$0xf] %vm753, %v664
      %758 = vst.msk [vmem:[%s213 + $0x10] sm:$0xf] %vm753, %v666
      %759 = vst.msk [vmem:[%s213 + $0x14] sm:$0xf] %vm753, %v668
      %760 = vst.msk [vmem:[%s213 + $0x18] sm:$0xf] %vm753, %v670
      %761 = vst.msk [vmem:[%s213 + $0x1c] sm:$0xf] %vm753, %v672
      %762 = vst.msk [vmem:[%s213 + $0x20] sm:$0xf] %vm753, %v674
      %763 = vst.msk [vmem:[%s213 + $0x24] sm:$0xf] %vm753, %v676
      %764 = vst.msk [vmem:[%s213 + $0x28] sm:$0xf] %vm753, %v678
      %765 = vst.msk [vmem:[%s213 + $0x2c] sm:$0xf] %vm753, %v680
      %766 = vst.msk [vmem:[%s213 + $0x30] sm:$0xf] %vm753, %v682
      %767 = vst.msk [vmem:[%s213 + $0x34] sm:$0xf] %vm753, %v684
      %768 = vst.msk [vmem:[%s213 + $0x38] sm:$0xf] %vm753, %v686
      %769 = vst.msk [vmem:[%s213 + $0x3c] sm:$0xf] %vm753, %v688
      %770 = vst.msk [vmem:[%s213 + $0x40] sm:$0xf] %vm753, %v690
      %771 = vst.msk [vmem:[%s213 + $0x44] sm:$0xf] %vm753, %v692
      %772 = vst.msk [vmem:[%s213 + $0x48] sm:$0xf] %vm753, %v694
      %773 = vst.msk [vmem:[%s213 + $0x4c] sm:$0xf] %vm753, %v696
      %774 = vst.msk [vmem:[%s213 + $0x50] sm:$0xf] %vm753, %v698
      %775 = vst.msk [vmem:[%s213 + $0x54] sm:$0xf] %vm753, %v700
      %776 = vst.msk [vmem:[%s213 + $0x58] sm:$0xf] %vm753, %v702
      %777 = vst.msk [vmem:[%s213 + $0x5c] sm:$0xf] %vm753, %v704
      %778 = vst.msk [vmem:[%s213 + $0x60] sm:$0xf] %vm753, %v706
      %779 = vst.msk [vmem:[%s213 + $0x64] sm:$0xf] %vm753, %v708
      %780 = vst.msk [vmem:[%s213 + $0x68] sm:$0xf] %vm753, %v710
      %781 = vst.msk [vmem:[%s213 + $0x6c] sm:$0xf] %vm753, %v712
      %782 = vst.msk [vmem:[%s213 + $0x70] sm:$0xf] %vm753, %v714
      %783 = vst.msk [vmem:[%s213 + $0x74] sm:$0xf] %vm753, %v716
      %784 = vst.msk [vmem:[%s213 + $0x78] sm:$0xf] %vm753, %v718
      %785 = vst.msk [vmem:[%s213 + $0x7c] sm:$0xf] %vm753, %v720
      %v786 = vpack.c.bf16 %v374, %v371
      %v787 = vpack.c.bf16 %v382, %v379
      %v788 = vpack.c.bf16 %v390, %v387
      %v789 = vpack.c.bf16 %v398, %v395
      %v790 = vpack.c.bf16 %v406, %v403
      %v791 = vpack.c.bf16 %v414, %v411
      %v792 = vpack.c.bf16 %v422, %v419
      %v793 = vpack.c.bf16 %v430, %v427
      %v794 = vpack.c.bf16 %v438, %v435
      %v795 = vpack.c.bf16 %v446, %v443
      %v796 = vpack.c.bf16 %v454, %v451
      %v797 = vpack.c.bf16 %v462, %v459
      %v798 = vpack.c.bf16 %v470, %v467
      %v799 = vpack.c.bf16 %v478, %v475
      %v800 = vpack.c.bf16 %v486, %v483
      %v801 = vpack.c.bf16 %v494, %v491
      %v818 = vunpack.c.l.b16 %v786
      %v819 = vunpack.c.h.b16 %v786
      %v820 = vunpack.c.l.b16 %v787
      %v821 = vunpack.c.h.b16 %v787
      %v822 = vunpack.c.l.b16 %v788
      %v823 = vunpack.c.h.b16 %v788
      %v824 = vunpack.c.l.b16 %v789
      %v825 = vunpack.c.h.b16 %v789
      %v826 = vunpack.c.l.b16 %v790
      %v827 = vunpack.c.h.b16 %v790
      %v828 = vunpack.c.l.b16 %v791
      %v829 = vunpack.c.h.b16 %v791
      %v830 = vunpack.c.l.b16 %v792
      %v831 = vunpack.c.h.b16 %v792
      %v832 = vunpack.c.l.b16 %v793
      %v833 = vunpack.c.h.b16 %v793
      %v834 = vunpack.c.l.b16 %v794
      %v835 = vunpack.c.h.b16 %v794
      %v836 = vunpack.c.l.b16 %v795
      %v837 = vunpack.c.h.b16 %v795
      %v838 = vunpack.c.l.b16 %v796
      %v839 = vunpack.c.h.b16 %v796
      %v840 = vunpack.c.l.b16 %v797
      %v841 = vunpack.c.h.b16 %v797
      %v842 = vunpack.c.l.b16 %v798
      %v843 = vunpack.c.h.b16 %v798
      %v844 = vunpack.c.l.b16 %v799
      %v845 = vunpack.c.h.b16 %v799
      %v846 = vunpack.c.l.b16 %v800
      %v847 = vunpack.c.h.b16 %v800
      %v848 = vunpack.c.l.b16 %v801
      %v849 = vunpack.c.h.b16 %v801
      %v850 = vpack.c.b16 %v818, %v818
      %v851 = vpack.c.b16 %v819, %v819
      %v852 = vpack.c.b16 %v820, %v820
      %v853 = vpack.c.b16 %v821, %v821
      %v854 = vpack.c.b16 %v822, %v822
      %v855 = vpack.c.b16 %v823, %v823
      %v856 = vpack.c.b16 %v824, %v824
      %v857 = vpack.c.b16 %v825, %v825
      %v858 = vpack.c.b16 %v826, %v826
      %v859 = vpack.c.b16 %v827, %v827
      %v860 = vpack.c.b16 %v828, %v828
      %v861 = vpack.c.b16 %v829, %v829
      %v862 = vpack.c.b16 %v830, %v830
      %v863 = vpack.c.b16 %v831, %v831
      %v864 = vpack.c.b16 %v832, %v832
      %v865 = vpack.c.b16 %v833, %v833
      %v866 = vpack.c.b16 %v834, %v834
      %v867 = vpack.c.b16 %v835, %v835
      %v868 = vpack.c.b16 %v836, %v836
      %v869 = vpack.c.b16 %v837, %v837
      %v870 = vpack.c.b16 %v838, %v838
      %v871 = vpack.c.b16 %v839, %v839
      %v872 = vpack.c.b16 %v840, %v840
      %v873 = vpack.c.b16 %v841, %v841
      %v874 = vpack.c.b16 %v842, %v842
      %v875 = vpack.c.b16 %v843, %v843
      %v876 = vpack.c.b16 %v844, %v844
      %v877 = vpack.c.b16 %v845, %v845
      %v878 = vpack.c.b16 %v846, %v846
      %v879 = vpack.c.b16 %v847, %v847
      %v880 = vpack.c.b16 %v848, %v848
      %v881 = vpack.c.b16 %v849, %v849
      %882 = vrot.lane.b32.xlu0 %v850, 96
      %v883 = vpop.permute.xlu0 %882
      %884 = vrot.lane.b32.xlu0 %v851, 96
      %v885 = vpop.permute.xlu0 %884
      %886 = vrot.lane.b32.xlu0 %v852, 96
      %v887 = vpop.permute.xlu0 %886
      %888 = vrot.lane.b32.xlu0 %v853, 96
      %v889 = vpop.permute.xlu0 %888
      %890 = vrot.lane.b32.xlu0 %v854, 96
      %v891 = vpop.permute.xlu0 %890
      %892 = vrot.lane.b32.xlu0 %v855, 96
      %v893 = vpop.permute.xlu0 %892
      %894 = vrot.lane.b32.xlu0 %v856, 96
      %v895 = vpop.permute.xlu0 %894
      %896 = vrot.lane.b32.xlu0 %v857, 96
      %v897 = vpop.permute.xlu0 %896
      %898 = vrot.lane.b32.xlu0 %v858, 96
      %v899 = vpop.permute.xlu0 %898
      %900 = vrot.lane.b32.xlu0 %v859, 96
      %v901 = vpop.permute.xlu0 %900
      %902 = vrot.lane.b32.xlu0 %v860, 96
      %v903 = vpop.permute.xlu0 %902
      %904 = vrot.lane.b32.xlu0 %v861, 96
      %v905 = vpop.permute.xlu0 %904
      %906 = vrot.lane.b32.xlu0 %v862, 96
      %v907 = vpop.permute.xlu0 %906
      %908 = vrot.lane.b32.xlu0 %v863, 96
      %v909 = vpop.permute.xlu0 %908
      %910 = vrot.lane.b32.xlu0 %v864, 96
      %v911 = vpop.permute.xlu0 %910
      %912 = vrot.lane.b32.xlu0 %v865, 96
      %v913 = vpop.permute.xlu0 %912
      %914 = vrot.lane.b32.xlu0 %v866, 96
      %v915 = vpop.permute.xlu0 %914
      %916 = vrot.lane.b32.xlu0 %v867, 96
      %v917 = vpop.permute.xlu0 %916
      %918 = vrot.lane.b32.xlu0 %v868, 96
      %v919 = vpop.permute.xlu0 %918
      %920 = vrot.lane.b32.xlu0 %v869, 96
      %v921 = vpop.permute.xlu0 %920
      %922 = vrot.lane.b32.xlu0 %v870, 96
      %v923 = vpop.permute.xlu0 %922
      %924 = vrot.lane.b32.xlu0 %v871, 96
      %v925 = vpop.permute.xlu0 %924
      %926 = vrot.lane.b32.xlu0 %v872, 96
      %v927 = vpop.permute.xlu0 %926
      %928 = vrot.lane.b32.xlu0 %v873, 96
      %v929 = vpop.permute.xlu0 %928
      %930 = vrot.lane.b32.xlu0 %v874, 96
      %v931 = vpop.permute.xlu0 %930
      %932 = vrot.lane.b32.xlu0 %v875, 96
      %v933 = vpop.permute.xlu0 %932
      %934 = vrot.lane.b32.xlu0 %v876, 96
      %v935 = vpop.permute.xlu0 %934
      %936 = vrot.lane.b32.xlu0 %v877, 96
      %v937 = vpop.permute.xlu0 %936
      %938 = vrot.lane.b32.xlu0 %v878, 96
      %v939 = vpop.permute.xlu0 %938
      %940 = vrot.lane.b32.xlu0 %v879, 96
      %v941 = vpop.permute.xlu0 %940
      %942 = vrot.lane.b32.xlu0 %v880, 96
      %v943 = vpop.permute.xlu0 %942
      %944 = vrot.lane.b32.xlu0 %v881, 96
      %v945 = vpop.permute.xlu0 %944
      %vm978 = vcmask 519424
      %979 = vst.msk [vmem:[%s213] sm:$0xf] %vm978, %v883
      %980 = vst.msk [vmem:[%s213 + $0x4] sm:$0xf] %vm978, %v885
      %981 = vst.msk [vmem:[%s213 + $0x8] sm:$0xf] %vm978, %v887
      %982 = vst.msk [vmem:[%s213 + $0xc] sm:$0xf] %vm978, %v889
      %983 = vst.msk [vmem:[%s213 + $0x10] sm:$0xf] %vm978, %v891
      %984 = vst.msk [vmem:[%s213 + $0x14] sm:$0xf] %vm978, %v893
      %985 = vst.msk [vmem:[%s213 + $0x18] sm:$0xf] %vm978, %v895
      %986 = vst.msk [vmem:[%s213 + $0x1c] sm:$0xf] %vm978, %v897
      %987 = vst.msk [vmem:[%s213 + $0x20] sm:$0xf] %vm978, %v899
      %988 = vst.msk [vmem:[%s213 + $0x24] sm:$0xf] %vm978, %v901
      %989 = vst.msk [vmem:[%s213 + $0x28] sm:$0xf] %vm978, %v903
      %990 = vst.msk [vmem:[%s213 + $0x2c] sm:$0xf] %vm978, %v905
      %991 = vst.msk [vmem:[%s213 + $0x30] sm:$0xf] %vm978, %v907
      %992 = vst.msk [vmem:[%s213 + $0x34] sm:$0xf] %vm978, %v909
      %993 = vst.msk [vmem:[%s213 + $0x38] sm:$0xf] %vm978, %v911
      %994 = vst.msk [vmem:[%s213 + $0x3c] sm:$0xf] %vm978, %v913
      %995 = vst.msk [vmem:[%s213 + $0x40] sm:$0xf] %vm978, %v915
      %996 = vst.msk [vmem:[%s213 + $0x44] sm:$0xf] %vm978, %v917
      %997 = vst.msk [vmem:[%s213 + $0x48] sm:$0xf] %vm978, %v919
      %998 = vst.msk [vmem:[%s213 + $0x4c] sm:$0xf] %vm978, %v921
      %999 = vst.msk [vmem:[%s213 + $0x50] sm:$0xf] %vm978, %v923
      %1000 = vst.msk [vmem:[%s213 + $0x54] sm:$0xf] %vm978, %v925
      %1001 = vst.msk [vmem:[%s213 + $0x58] sm:$0xf] %vm978, %v927
      %1002 = vst.msk [vmem:[%s213 + $0x5c] sm:$0xf] %vm978, %v929
      %1003 = vst.msk [vmem:[%s213 + $0x60] sm:$0xf] %vm978, %v931
      %1004 = vst.msk [vmem:[%s213 + $0x64] sm:$0xf] %vm978, %v933
      %1005 = vst.msk [vmem:[%s213 + $0x68] sm:$0xf] %vm978, %v935
      %1006 = vst.msk [vmem:[%s213 + $0x6c] sm:$0xf] %vm978, %v937
      %1007 = vst.msk [vmem:[%s213 + $0x70] sm:$0xf] %vm978, %v939
      %1008 = vst.msk [vmem:[%s213 + $0x74] sm:$0xf] %vm978, %v941
      %1009 = vst.msk [vmem:[%s213 + $0x78] sm:$0xf] %vm978, %v943
      %1010 = vst.msk [vmem:[%s213 + $0x7c] sm:$0xf] %vm978, %v945
      %s1011 = smul.u32 32, %s16
      %p1012 = scmp.lt.s32.totalorder %s1011, 127
      %s1013 = scalar_select %p1012, %s1011, 127
      %s1014 = smul.addr %s1013, 8
      %s1015 = scalar_lea.vmem %s3, %s1014
      %s1016 = smul.u32 32, %s16
      %p1017 = scmp.lt.s32.totalorder %s1016, 127
      %s1018 = scalar_select %p1017, %s1016, 127
      %s1019 = smul.addr %s1018, 4
      %s1020 = scalar_lea.vmem %s4, %s1019
      // Predicated region
      $region33: #{tpu_custom_call.1} parent=31 // pred_check
        %p1021 = pneg %p102
      $region34: #{tpu_custom_call.1} parent=31 // pred_check_branch
        %1023 = sbr.rel (%p1021) target = $region36
      $region35: #{tpu_custom_call.1} parent=31 // pred_region
        %s1024 = smul.u32 32, %s16
      $region36: #{tpu_custom_call.1} parent=31 // pred_fallthru
        _
      // Predicated region
      $region37: #{tpu_custom_call.1} parent=31 // pred_check
        %p1025 = pneg %p128
      $region38: #{tpu_custom_call.1} parent=31 // pred_check_branch
        %1027 = sbr.rel (%p1025) target = $region40
      $region39: #{tpu_custom_call.1} parent=31 // pred_region
        %s1028 = smul.u32 32, %s16
      $region40: #{tpu_custom_call.1} parent=31 // pred_fallthru
        _
    $region32: #{tpu_custom_call.1} parent=5 // pred_fallthru
      _
    %p1029 = scmp.le.s32.totalorder 2, %s11
    // Predicated region
    $region41: #{tpu_custom_call.1} parent=5 // pred_check
      %p1030 = pneg %p1029
    $region42: #{tpu_custom_call.1} parent=5 // pred_check_branch
      %1032 = sbr.rel (%p1030) target = $region44
    $region43: #{tpu_custom_call.1} parent=5 // pred_region
      %s1033 = ssub.s32 %s11, 2
      // Predicated region
      $region45: #{tpu_custom_call.1} parent=43 // pred_check
        %p1034 = pneg %p108
      $region46: #{tpu_custom_call.1} parent=43 // pred_check_branch
        %1036 = sbr.rel (%p1034) target = $region48
      $region47: #{tpu_custom_call.1} parent=43 // pred_region
        %s1037 = smul.u32 32, %s17
        %p1038 = scmp.lt.s32.totalorder %s1037, 127
        %s1039 = scalar_select %p1038, %s1037, 127
        %s1040 = smul.addr %s1039, 8
        %s1041 = scalar_lea.vmem %s3, %s1040
      $region48: #{tpu_custom_call.1} parent=43 // pred_fallthru
        _
      // Predicated region
      $region49: #{tpu_custom_call.1} parent=43 // pred_check
        %p1042 = pneg %p134
      $region50: #{tpu_custom_call.1} parent=43 // pred_check_branch
        %1044 = sbr.rel (%p1042) target = $region52
      $region51: #{tpu_custom_call.1} parent=43 // pred_region
        %s1045 = smul.u32 32, %s17
        %p1046 = scmp.lt.s32.totalorder %s1045, 127
        %s1047 = scalar_select %p1046, %s1045, 127
        %s1048 = smul.addr %s1047, 4
        %s1049 = scalar_lea.vmem %s4, %s1048
      $region52: #{tpu_custom_call.1} parent=43 // pred_fallthru
        _
    $region44: #{tpu_custom_call.1} parent=5 // pred_fallthru
      _
  $region6: #{tpu_custom_call.1} parent=0 // loop_footer
    %s15 = sadd.s32 1, %s11
  $region7: #{tpu_custom_call.1} parent=0 // loop_footer_branch
    %10 = sbr.rel target = $region3
  $region8: #{tpu_custom_call.1} parent=0 // loop_exit
    _

</llo_original>
